<compile_context>
chip_gen: v7x
topology: tpu7x:2x2x1
jax: 0.10.0
libtpu: 0.0.40
codegen_flags: <defaults>
</compile_context>

<pallas_src>
from functools import partial

import jax
import jax.numpy as jnp
from jax.experimental import pallas as pl
from jax.experimental.pallas import tpu as pltpu


def jrvs_kernel(x2d_ref, hc0_ref, w_ref, b_ref, y_ref, hc_ref,
                *, T, B, I, H, O, off_whh, off_wfc):
    """Whole forward in one kernel invocation (shapes are small -> single VMEM residency).

    x2d_ref : (T*B, I)  bf16  time-major, flattened input sequence
    hc0_ref : (2, B, H) f32   stacked (h0, c0) initial state (aliased to hc_ref)
    w_ref   : (R, 4H)   bf16  packed [Wih_t | Whh_t | Wfc_t(padded)] rows, 8-row aligned;
                              g-gate columns of Wih/Whh pre-doubled (tanh-via-sigmoid)
    b_ref   : (2, 4H)   f32   row 0 = b_ih + b_hh (g block pre-doubled), row 1 = fc bias
    y_ref   : (B, O)    f32   fc(out[:, -1, :])
    hc_ref  : (2, B, H) f32   stacked (hT, cT)
    """
    G = 4 * H
    wih_bf = w_ref[0:I, :]                   # (I, 4H) bf16
    whh_bf = w_ref[off_whh:off_whh + H, :]   # (H, 4H) bf16
    wfc_bf = w_ref[off_wfc:off_wfc + H, :]   # (H, 4H) bf16 (cols >= O are zero)
    b_rec = b_ref[0:1, :]                    # (1, 4H) f32
    b_fc = b_ref[1:2, 0:O]                   # (1, O)  f32

    # --- Hoisted input projection: all T steps in ONE MXU matmul, bias folded in. ---
    xw = jnp.dot(x2d_ref[...], wih_bf, preferred_element_type=jnp.float32) + b_rec
    xw = xw.reshape(T, B, G)   # time-major slab: xw[t] below is a free tile select
    # TODO(synk): for large T/B, chunk T over a grid "arbitrary" axis (or emit_pipeline)
    # and carry h/c in VMEM scratch so xw is never fully resident (v7x VMEM is 64 MiB).

    h = hc0_ref[0]   # (B, H) f32
    c = hc0_ref[1]   # (B, H) f32

    # --- Fully unrolled recurrence: h@Whh + one sigmoid pass + VPU math on the serial path. ---
    for t in range(T):
        gates = xw[t] + jnp.dot(h.astype(jnp.bfloat16), whh_bf,
                                preferred_element_type=jnp.float32)   # (B, 4H) f32
        sg = jax.nn.sigmoid(gates)              # single full-width EUP pass (i, f, o, 2g)
        i_g = sg[:, 0 * H:1 * H]
        f_g = sg[:, 1 * H:2 * H]
        g_g = 2.0 * sg[:, 2 * H:3 * H] - 1.0    # tanh(x) = 2*sigmoid(2x) - 1 (VPU fixup)
        o_g = sg[:, 3 * H:4 * H]
        c = f_g * c + i_g * g_g
        h = o_g * jnp.tanh(c)                   # second (and last) EUP pass of the step

    hc_ref[0] = h
    hc_ref[1] = c
    # fc on the last timestep output (== hT); single bf16 MXU push, off the hot loop.
    y_full = jnp.dot(h.astype(jnp.bfloat16), wfc_bf, preferred_element_type=jnp.float32)
    y_ref[...] = y_full[:, 0:O] + b_fc


def _ceil8(n):
    return -(-n // 8) * 8


def init_params(key, input_size, hidden_size, output_size):
    """Deterministic parameter init mirroring PyTorch shapes (uniform +/- 1/sqrt(H))."""
    k = 1.0 / jnp.sqrt(jnp.float32(hidden_size))
    keys = jax.random.split(key, 6)
    w_ih = jax.random.uniform(keys[0], (4 * hidden_size, input_size), jnp.float32, -k, k)
    w_hh = jax.random.uniform(keys[1], (4 * hidden_size, hidden_size), jnp.float32, -k, k)
    b_ih = jax.random.uniform(keys[2], (4 * hidden_size,), jnp.float32, -k, k)
    b_hh = jax.random.uniform(keys[3], (4 * hidden_size,), jnp.float32, -k, k)
    w_fc = jax.random.uniform(keys[4], (output_size, hidden_size), jnp.float32, -k, k)
    b_fc = jax.random.uniform(keys[5], (output_size,), jnp.float32, -k, k)
    return {
        "wih_t": w_ih.T,                                    # (I, 4H)
        "whh_t": w_hh.T,                                    # (H, 4H)
        "bias": (b_ih + b_hh).reshape(1, 4 * hidden_size),  # (1, 4H)
        "wfc_t": w_fc.T,                                    # (H, O)
        "bfc": b_fc.reshape(1, output_size),                # (1, O)
    }


def pack_params(params, input_size):
    """One-time packing/pre-casting of parameters for the kernel (done once, off hot path).

    Returns (w_packed bf16, b_packed f32, dims) where dims are static Python ints.
    """
    I = int(input_size)
    H = int(params["whh_t"].shape[0])
    O = int(params["wfc_t"].shape[1])
    G = 4 * H

    # tanh(x) = 2*sigmoid(2x) - 1: pre-double the g-gate columns so the kernel needs only
    # one sigmoid EUP pass per step plus a VPU fixup.
    gate_scale = jnp.concatenate(
        [jnp.ones((2 * H,)), jnp.full((H,), 2.0), jnp.ones((H,))]).astype(jnp.float32)
    wih = params["wih_t"] * gate_scale     # (I, 4H)
    whh = params["whh_t"] * gate_scale     # (H, 4H)
    brec = params["bias"] * gate_scale     # (1, 4H)

    off_whh = _ceil8(I)
    off_wfc = off_whh + _ceil8(H)
    rows = off_wfc + _ceil8(H)

    w_packed = jnp.zeros((rows, G), jnp.float32)
    w_packed = w_packed.at[0:I, :].set(wih)
    w_packed = w_packed.at[off_whh:off_whh + H, :].set(whh)
    w_packed = w_packed.at[off_wfc:off_wfc + H, 0:O].set(params["wfc_t"])
    w_packed = w_packed.astype(jnp.bfloat16)   # pre-cast once: MXU operands travel as bf16

    b_packed = jnp.zeros((2, G), jnp.float32)
    b_packed = b_packed.at[0:1, :].set(brec)
    b_packed = b_packed.at[1:2, 0:O].set(params["bfc"])

    dims = (I, H, O, off_whh, off_wfc)
    return w_packed, b_packed, dims


def jrvs_forward(x, hidden, w_packed, b_packed, *, dims):
    """x: (B, T, I) float32, hidden = (h0, c0) each (1, B, H). Returns (y, (hT, cT))."""
    h0, c0 = hidden
    B, T, _ = x.shape
    I, H, O, off_whh, off_wfc = dims

    # Layout plumbing stays outside the kernel (off the serial recurrence path):
    # time-major + flattened (T*B, I) bf16 so the hoisted projection is one MXU matmul
    # whose (T, B, 4H) result gives free per-step tile selects inside the kernel.
    x2d = jnp.transpose(x, (1, 0, 2)).reshape(T * B, I).astype(jnp.bfloat16)
    hc0 = jnp.concatenate([h0, c0], axis=0).astype(jnp.float32)   # (2, B, H)

    vmem = pl.BlockSpec(memory_space=pltpu.MemorySpace.VMEM)
    kernel = partial(jrvs_kernel, T=T, B=B, I=I, H=H, O=O,
                     off_whh=off_whh, off_wfc=off_wfc)

    # TODO(synk): if batch grows, add a grid over B with dimension_semantics=("parallel",)
    # so the batch-independent recurrences shard across v7x's two TensorCores.
    y, hc = pl.pallas_call(
        kernel,
        out_shape=(
            jax.ShapeDtypeStruct((B, O), jnp.float32),
            jax.ShapeDtypeStruct((2, B, H), jnp.float32),
        ),
        in_specs=[vmem, vmem, vmem, vmem],
        out_specs=(vmem, vmem),
        input_output_aliases={1: 1},   # hc0 (a wrapper temp) reuses the hc output buffer
    )(x2d, hc0, w_packed, b_packed)

    return y, (hc[0:1], hc[1:2])


def _reference(x, h0, c0, params):
    """Pure-JAX f32 reference matching PyTorch LSTM + Linear semantics."""
    wih, whh = params["wih_t"], params["whh_t"]
    b = params["bias"][0]
    H = whh.shape[0]
    h, c = h0[0], c0[0]
    for t in range(x.shape[1]):
        gates = x[:, t, :] @ wih + h @ whh + b
        i = jax.nn.sigmoid(gates[:, 0 * H:1 * H])
        f = jax.nn.sigmoid(gates[:, 1 * H:2 * H])
        g = jnp.tanh(gates[:, 2 * H:3 * H])
        o = jax.nn.sigmoid(gates[:, 3 * H:4 * H])
        c = f * c + i * g
        h = o * jnp.tanh(c)
    y = h @ params["wfc_t"] + params["bfc"][0]
    return y, h, c


if __name__ == "__main__":
    input_size, hidden_size, output_size = 4, 32, 8
    batch, seq = 2, 8

    key = jax.random.PRNGKey(0)
    kx, kp = jax.random.split(key)
    x = jax.random.normal(kx, (batch, seq, input_size), jnp.float32)
    # init_hidden(batch): zeros of shape (1, B, H)
    h0 = jnp.zeros((1, batch, hidden_size), jnp.float32)
    c0 = jnp.zeros((1, batch, hidden_size), jnp.float32)

    params = init_params(kp, input_size, hidden_size, output_size)
    w_packed, b_packed, dims = pack_params(params, input_size)

    fwd = jax.jit(jrvs_forward, static_argnames=("dims",))
    y, (hT, cT) = fwd(x, (h0, c0), w_packed, b_packed, dims=dims)
    jax.block_until_ready((y, hT, cT))

    assert y.shape == (batch, output_size)
    assert hT.shape == (1, batch, hidden_size)
    assert cT.shape == (1, batch, hidden_size)

    # Numerical check vs. f32 reference (bf16 MXU operands -> relaxed tolerance).
    y_ref, h_ref, c_ref = _reference(x, h0, c0, params)
    assert bool(jnp.allclose(y, y_ref, atol=5e-2, rtol=5e-2))
    assert bool(jnp.allclose(hT[0], h_ref, atol=5e-2, rtol=5e-2))
    assert bool(jnp.allclose(cT[0], c_ref, atol=5e-2, rtol=5e-2))

    print("KERNEL_OK")
</pallas_src>

<mosaic_0001>
module attributes {stable_mosaic.version = 11 : i64} {
  func.func @jrvs_kernel(%arg0: memref<16x4xbf16, #tpu.memory_space<vmem>>, %arg1: memref<2x2x32xf32, #tpu.memory_space<vmem>>, %arg2: memref<72x128xbf16, #tpu.memory_space<vmem>>, %arg3: memref<2x128xf32, #tpu.memory_space<vmem>>, %arg4: memref<2x8xf32, #tpu.memory_space<vmem>>, %arg5: memref<2x2x32xf32, #tpu.memory_space<vmem>>) attributes {dimension_semantics = [], scalar_prefetch = 0 : i64, scratch_operands = 0 : i64, tpu.core_type = #tpu.core_type<tc>} {
    %c0 = arith.constant 0 : index
    %c0_0 = arith.constant 0 : index
    %0 = vector.load %arg2[%c0, %c0_0] : memref<72x128xbf16, #tpu.memory_space<vmem>>, vector<4x128xbf16>
    %c8 = arith.constant 8 : index
    %c0_1 = arith.constant 0 : index
    %1 = vector.load %arg2[%c8, %c0_1] : memref<72x128xbf16, #tpu.memory_space<vmem>>, vector<32x128xbf16>
    %c40 = arith.constant 40 : index
    %c0_2 = arith.constant 0 : index
    %2 = vector.load %arg2[%c40, %c0_2] : memref<72x128xbf16, #tpu.memory_space<vmem>>, vector<32x128xbf16>
    %c0_3 = arith.constant 0 : index
    %c0_4 = arith.constant 0 : index
    %3 = vector.load %arg3[%c0_3, %c0_4] : memref<2x128xf32, #tpu.memory_space<vmem>>, vector<1x128xf32>
    %c1 = arith.constant 1 : index
    %c0_5 = arith.constant 0 : index
    %4 = vector.load %arg3[%c1, %c0_5] : memref<2x128xf32, #tpu.memory_space<vmem>>, vector<1x8xf32>
    %c0_6 = arith.constant 0 : index
    %c0_7 = arith.constant 0 : index
    %5 = vector.load %arg0[%c0_6, %c0_7] : memref<16x4xbf16, #tpu.memory_space<vmem>>, vector<16x4xbf16>
    %cst = arith.constant dense<0.000000e+00> : vector<16x128xf32>
    %6 = tpu.matmul %5, %0, %cst {dimension_numbers = #tpu.dot_dimension_numbers<[1], [0], [0], [1], [0, 0, 1, 1], [], []>} : vector<16x4xbf16>, vector<4x128xbf16>, vector<16x128xf32> -> vector<16x128xf32>
    %7 = vector.broadcast %3 : vector<1x128xf32> to vector<16x128xf32>
    %8 = arith.addf %6, %7 : vector<16x128xf32>
    %9 = vector.shape_cast %8 : vector<16x128xf32> to vector<8x2x128xf32>
    %c0_8 = arith.constant 0 : index
    %c0_9 = arith.constant 0 : index
    %c0_10 = arith.constant 0 : index
    %10 = vector.load %arg1[%c0_8, %c0_9, %c0_10] : memref<2x2x32xf32, #tpu.memory_space<vmem>>, vector<1x2x32xf32>
    %11 = vector.shape_cast %10 : vector<1x2x32xf32> to vector<2x32xf32>
    %c1_11 = arith.constant 1 : index
    %c0_12 = arith.constant 0 : index
    %c0_13 = arith.constant 0 : index
    %12 = vector.load %arg1[%c1_11, %c0_12, %c0_13] : memref<2x2x32xf32, #tpu.memory_space<vmem>>, vector<1x2x32xf32>
    %13 = vector.shape_cast %12 : vector<1x2x32xf32> to vector<2x32xf32>
    %14 = vector.extract_strided_slice %9 {offsets = [0, 0, 0], sizes = [1, 2, 128], strides = [1, 1, 1]} : vector<8x2x128xf32> to vector<1x2x128xf32>
    %15 = vector.shape_cast %14 : vector<1x2x128xf32> to vector<2x128xf32>
    %16 = arith.truncf %11 : vector<2x32xf32> to vector<2x32xbf16>
    %cst_14 = arith.constant dense<0.000000e+00> : vector<2x128xf32>
    %17 = tpu.matmul %16, %1, %cst_14 {dimension_numbers = #tpu.dot_dimension_numbers<[1], [0], [0], [1], [0, 0, 1, 1], [], []>} : vector<2x32xbf16>, vector<32x128xbf16>, vector<2x128xf32> -> vector<2x128xf32>
    %18 = arith.addf %15, %17 : vector<2x128xf32>
    %19 = arith.negf %18 : vector<2x128xf32>
    %20 = math.exp %19 : vector<2x128xf32>
    %cst_15 = arith.constant 1.000000e+00 : f32
    %21 = vector.broadcast %cst_15 : f32 to vector<2x128xf32>
    %22 = arith.addf %21, %20 : vector<2x128xf32>
    %23 = arith.divf %21, %22 : vector<2x128xf32>
    %24 = vector.extract_strided_slice %23 {offsets = [0, 0], sizes = [2, 32], strides = [1, 1]} : vector<2x128xf32> to vector<2x32xf32>
    %25 = vector.extract_strided_slice %23 {offsets = [0, 32], sizes = [2, 32], strides = [1, 1]} : vector<2x128xf32> to vector<2x32xf32>
    %26 = vector.extract_strided_slice %23 {offsets = [0, 64], sizes = [2, 32], strides = [1, 1]} : vector<2x128xf32> to vector<2x32xf32>
    %cst_16 = arith.constant 2.000000e+00 : f32
    %27 = vector.broadcast %cst_16 : f32 to vector<2x32xf32>
    %28 = arith.mulf %27, %26 : vector<2x32xf32>
    %cst_17 = arith.constant 1.000000e+00 : f32
    %29 = vector.broadcast %cst_17 : f32 to vector<2x32xf32>
    %30 = arith.subf %28, %29 : vector<2x32xf32>
    %31 = vector.extract_strided_slice %23 {offsets = [0, 96], sizes = [2, 32], strides = [1, 1]} : vector<2x128xf32> to vector<2x32xf32>
    %32 = arith.mulf %25, %13 : vector<2x32xf32>
    %33 = arith.mulf %24, %30 : vector<2x32xf32>
    %34 = arith.addf %32, %33 : vector<2x32xf32>
    %35 = math.tanh %34 : vector<2x32xf32>
    %36 = arith.mulf %31, %35 : vector<2x32xf32>
    %37 = vector.extract_strided_slice %9 {offsets = [1, 0, 0], sizes = [1, 2, 128], strides = [1, 1, 1]} : vector<8x2x128xf32> to vector<1x2x128xf32>
    %38 = vector.shape_cast %37 : vector<1x2x128xf32> to vector<2x128xf32>
    %39 = arith.truncf %36 : vector<2x32xf32> to vector<2x32xbf16>
    %cst_18 = arith.constant dense<0.000000e+00> : vector<2x128xf32>
    %40 = tpu.matmul %39, %1, %cst_18 {dimension_numbers = #tpu.dot_dimension_numbers<[1], [0], [0], [1], [0, 0, 1, 1], [], []>} : vector<2x32xbf16>, vector<32x128xbf16>, vector<2x128xf32> -> vector<2x128xf32>
    %41 = arith.addf %38, %40 : vector<2x128xf32>
    %42 = arith.negf %41 : vector<2x128xf32>
    %43 = math.exp %42 : vector<2x128xf32>
    %cst_19 = arith.constant 1.000000e+00 : f32
    %44 = vector.broadcast %cst_19 : f32 to vector<2x128xf32>
    %45 = arith.addf %44, %43 : vector<2x128xf32>
    %46 = arith.divf %44, %45 : vector<2x128xf32>
    %47 = vector.extract_strided_slice %46 {offsets = [0, 0], sizes = [2, 32], strides = [1, 1]} : vector<2x128xf32> to vector<2x32xf32>
    %48 = vector.extract_strided_slice %46 {offsets = [0, 32], sizes = [2, 32], strides = [1, 1]} : vector<2x128xf32> to vector<2x32xf32>
    %49 = vector.extract_strided_slice %46 {offsets = [0, 64], sizes = [2, 32], strides = [1, 1]} : vector<2x128xf32> to vector<2x32xf32>
    %cst_20 = arith.constant 2.000000e+00 : f32
    %50 = vector.broadcast %cst_20 : f32 to vector<2x32xf32>
    %51 = arith.mulf %50, %49 : vector<2x32xf32>
    %cst_21 = arith.constant 1.000000e+00 : f32
    %52 = vector.broadcast %cst_21 : f32 to vector<2x32xf32>
    %53 = arith.subf %51, %52 : vector<2x32xf32>
    %54 = vector.extract_strided_slice %46 {offsets = [0, 96], sizes = [2, 32], strides = [1, 1]} : vector<2x128xf32> to vector<2x32xf32>
    %55 = arith.mulf %48, %34 : vector<2x32xf32>
    %56 = arith.mulf %47, %53 : vector<2x32xf32>
    %57 = arith.addf %55, %56 : vector<2x32xf32>
    %58 = math.tanh %57 : vector<2x32xf32>
    %59 = arith.mulf %54, %58 : vector<2x32xf32>
    %60 = vector.extract_strided_slice %9 {offsets = [2, 0, 0], sizes = [1, 2, 128], strides = [1, 1, 1]} : vector<8x2x128xf32> to vector<1x2x128xf32>
    %61 = vector.shape_cast %60 : vector<1x2x128xf32> to vector<2x128xf32>
    %62 = arith.truncf %59 : vector<2x32xf32> to vector<2x32xbf16>
    %cst_22 = arith.constant dense<0.000000e+00> : vector<2x128xf32>
    %63 = tpu.matmul %62, %1, %cst_22 {dimension_numbers = #tpu.dot_dimension_numbers<[1], [0], [0], [1], [0, 0, 1, 1], [], []>} : vector<2x32xbf16>, vector<32x128xbf16>, vector<2x128xf32> -> vector<2x128xf32>
    %64 = arith.addf %61, %63 : vector<2x128xf32>
    %65 = arith.negf %64 : vector<2x128xf32>
    %66 = math.exp %65 : vector<2x128xf32>
    %cst_23 = arith.constant 1.000000e+00 : f32
    %67 = vector.broadcast %cst_23 : f32 to vector<2x128xf32>
    %68 = arith.addf %67, %66 : vector<2x128xf32>
    %69 = arith.divf %67, %68 : vector<2x128xf32>
    %70 = vector.extract_strided_slice %69 {offsets = [0, 0], sizes = [2, 32], strides = [1, 1]} : vector<2x128xf32> to vector<2x32xf32>
    %71 = vector.extract_strided_slice %69 {offsets = [0, 32], sizes = [2, 32], strides = [1, 1]} : vector<2x128xf32> to vector<2x32xf32>
    %72 = vector.extract_strided_slice %69 {offsets = [0, 64], sizes = [2, 32], strides = [1, 1]} : vector<2x128xf32> to vector<2x32xf32>
    %cst_24 = arith.constant 2.000000e+00 : f32
    %73 = vector.broadcast %cst_24 : f32 to vector<2x32xf32>
    %74 = arith.mulf %73, %72 : vector<2x32xf32>
    %cst_25 = arith.constant 1.000000e+00 : f32
    %75 = vector.broadcast %cst_25 : f32 to vector<2x32xf32>
    %76 = arith.subf %74, %75 : vector<2x32xf32>
    %77 = vector.extract_strided_slice %69 {offsets = [0, 96], sizes = [2, 32], strides = [1, 1]} : vector<2x128xf32> to vector<2x32xf32>
    %78 = arith.mulf %71, %57 : vector<2x32xf32>
    %79 = arith.mulf %70, %76 : vector<2x32xf32>
    %80 = arith.addf %78, %79 : vector<2x32xf32>
    %81 = math.tanh %80 : vector<2x32xf32>
    %82 = arith.mulf %77, %81 : vector<2x32xf32>
    %83 = vector.extract_strided_slice %9 {offsets = [3, 0, 0], sizes = [1, 2, 128], strides = [1, 1, 1]} : vector<8x2x128xf32> to vector<1x2x128xf32>
    %84 = vector.shape_cast %83 : vector<1x2x128xf32> to vector<2x128xf32>
    %85 = arith.truncf %82 : vector<2x32xf32> to vector<2x32xbf16>
    %cst_26 = arith.constant dense<0.000000e+00> : vector<2x128xf32>
    %86 = tpu.matmul %85, %1, %cst_26 {dimension_numbers = #tpu.dot_dimension_numbers<[1], [0], [0], [1], [0, 0, 1, 1], [], []>} : vector<2x32xbf16>, vector<32x128xbf16>, vector<2x128xf32> -> vector<2x128xf32>
    %87 = arith.addf %84, %86 : vector<2x128xf32>
    %88 = arith.negf %87 : vector<2x128xf32>
    %89 = math.exp %88 : vector<2x128xf32>
    %cst_27 = arith.constant 1.000000e+00 : f32
    %90 = vector.broadcast %cst_27 : f32 to vector<2x128xf32>
    %91 = arith.addf %90, %89 : vector<2x128xf32>
    %92 = arith.divf %90, %91 : vector<2x128xf32>
    %93 = vector.extract_strided_slice %92 {offsets = [0, 0], sizes = [2, 32], strides = [1, 1]} : vector<2x128xf32> to vector<2x32xf32>
    %94 = vector.extract_strided_slice %92 {offsets = [0, 32], sizes = [2, 32], strides = [1, 1]} : vector<2x128xf32> to vector<2x32xf32>
    %95 = vector.extract_strided_slice %92 {offsets = [0, 64], sizes = [2, 32], strides = [1, 1]} : vector<2x128xf32> to vector<2x32xf32>
    %cst_28 = arith.constant 2.000000e+00 : f32
    %96 = vector.broadcast %cst_28 : f32 to vector<2x32xf32>
    %97 = arith.mulf %96, %95 : vector<2x32xf32>
    %cst_29 = arith.constant 1.000000e+00 : f32
    %98 = vector.broadcast %cst_29 : f32 to vector<2x32xf32>
    %99 = arith.subf %97, %98 : vector<2x32xf32>
    %100 = vector.extract_strided_slice %92 {offsets = [0, 96], sizes = [2, 32], strides = [1, 1]} : vector<2x128xf32> to vector<2x32xf32>
    %101 = arith.mulf %94, %80 : vector<2x32xf32>
    %102 = arith.mulf %93, %99 : vector<2x32xf32>
    %103 = arith.addf %101, %102 : vector<2x32xf32>
    %104 = math.tanh %103 : vector<2x32xf32>
    %105 = arith.mulf %100, %104 : vector<2x32xf32>
    %106 = vector.extract_strided_slice %9 {offsets = [4, 0, 0], sizes = [1, 2, 128], strides = [1, 1, 1]} : vector<8x2x128xf32> to vector<1x2x128xf32>
    %107 = vector.shape_cast %106 : vector<1x2x128xf32> to vector<2x128xf32>
    %108 = arith.truncf %105 : vector<2x32xf32> to vector<2x32xbf16>
    %cst_30 = arith.constant dense<0.000000e+00> : vector<2x128xf32>
    %109 = tpu.matmul %108, %1, %cst_30 {dimension_numbers = #tpu.dot_dimension_numbers<[1], [0], [0], [1], [0, 0, 1, 1], [], []>} : vector<2x32xbf16>, vector<32x128xbf16>, vector<2x128xf32> -> vector<2x128xf32>
    %110 = arith.addf %107, %109 : vector<2x128xf32>
    %111 = arith.negf %110 : vector<2x128xf32>
    %112 = math.exp %111 : vector<2x128xf32>
    %cst_31 = arith.constant 1.000000e+00 : f32
    %113 = vector.broadcast %cst_31 : f32 to vector<2x128xf32>
    %114 = arith.addf %113, %112 : vector<2x128xf32>
    %115 = arith.divf %113, %114 : vector<2x128xf32>
    %116 = vector.extract_strided_slice %115 {offsets = [0, 0], sizes = [2, 32], strides = [1, 1]} : vector<2x128xf32> to vector<2x32xf32>
    %117 = vector.extract_strided_slice %115 {offsets = [0, 32], sizes = [2, 32], strides = [1, 1]} : vector<2x128xf32> to vector<2x32xf32>
    %118 = vector.extract_strided_slice %115 {offsets = [0, 64], sizes = [2, 32], strides = [1, 1]} : vector<2x128xf32> to vector<2x32xf32>
    %cst_32 = arith.constant 2.000000e+00 : f32
    %119 = vector.broadcast %cst_32 : f32 to vector<2x32xf32>
    %120 = arith.mulf %119, %118 : vector<2x32xf32>
    %cst_33 = arith.constant 1.000000e+00 : f32
    %121 = vector.broadcast %cst_33 : f32 to vector<2x32xf32>
    %122 = arith.subf %120, %121 : vector<2x32xf32>
    %123 = vector.extract_strided_slice %115 {offsets = [0, 96], sizes = [2, 32], strides = [1, 1]} : vector<2x128xf32> to vector<2x32xf32>
    %124 = arith.mulf %117, %103 : vector<2x32xf32>
    %125 = arith.mulf %116, %122 : vector<2x32xf32>
    %126 = arith.addf %124, %125 : vector<2x32xf32>
    %127 = math.tanh %126 : vector<2x32xf32>
    %128 = arith.mulf %123, %127 : vector<2x32xf32>
    %129 = vector.extract_strided_slice %9 {offsets = [5, 0, 0], sizes = [1, 2, 128], strides = [1, 1, 1]} : vector<8x2x128xf32> to vector<1x2x128xf32>
    %130 = vector.shape_cast %129 : vector<1x2x128xf32> to vector<2x128xf32>
    %131 = arith.truncf %128 : vector<2x32xf32> to vector<2x32xbf16>
    %cst_34 = arith.constant dense<0.000000e+00> : vector<2x128xf32>
    %132 = tpu.matmul %131, %1, %cst_34 {dimension_numbers = #tpu.dot_dimension_numbers<[1], [0], [0], [1], [0, 0, 1, 1], [], []>} : vector<2x32xbf16>, vector<32x128xbf16>, vector<2x128xf32> -> vector<2x128xf32>
    %133 = arith.addf %130, %132 : vector<2x128xf32>
    %134 = arith.negf %133 : vector<2x128xf32>
    %135 = math.exp %134 : vector<2x128xf32>
    %cst_35 = arith.constant 1.000000e+00 : f32
    %136 = vector.broadcast %cst_35 : f32 to vector<2x128xf32>
    %137 = arith.addf %136, %135 : vector<2x128xf32>
    %138 = arith.divf %136, %137 : vector<2x128xf32>
    %139 = vector.extract_strided_slice %138 {offsets = [0, 0], sizes = [2, 32], strides = [1, 1]} : vector<2x128xf32> to vector<2x32xf32>
    %140 = vector.extract_strided_slice %138 {offsets = [0, 32], sizes = [2, 32], strides = [1, 1]} : vector<2x128xf32> to vector<2x32xf32>
    %141 = vector.extract_strided_slice %138 {offsets = [0, 64], sizes = [2, 32], strides = [1, 1]} : vector<2x128xf32> to vector<2x32xf32>
    %cst_36 = arith.constant 2.000000e+00 : f32
    %142 = vector.broadcast %cst_36 : f32 to vector<2x32xf32>
    %143 = arith.mulf %142, %141 : vector<2x32xf32>
    %cst_37 = arith.constant 1.000000e+00 : f32
    %144 = vector.broadcast %cst_37 : f32 to vector<2x32xf32>
    %145 = arith.subf %143, %144 : vector<2x32xf32>
    %146 = vector.extract_strided_slice %138 {offsets = [0, 96], sizes = [2, 32], strides = [1, 1]} : vector<2x128xf32> to vector<2x32xf32>
    %147 = arith.mulf %140, %126 : vector<2x32xf32>
    %148 = arith.mulf %139, %145 : vector<2x32xf32>
    %149 = arith.addf %147, %148 : vector<2x32xf32>
    %150 = math.tanh %149 : vector<2x32xf32>
    %151 = arith.mulf %146, %150 : vector<2x32xf32>
    %152 = vector.extract_strided_slice %9 {offsets = [6, 0, 0], sizes = [1, 2, 128], strides = [1, 1, 1]} : vector<8x2x128xf32> to vector<1x2x128xf32>
    %153 = vector.shape_cast %152 : vector<1x2x128xf32> to vector<2x128xf32>
    %154 = arith.truncf %151 : vector<2x32xf32> to vector<2x32xbf16>
    %cst_38 = arith.constant dense<0.000000e+00> : vector<2x128xf32>
    %155 = tpu.matmul %154, %1, %cst_38 {dimension_numbers = #tpu.dot_dimension_numbers<[1], [0], [0], [1], [0, 0, 1, 1], [], []>} : vector<2x32xbf16>, vector<32x128xbf16>, vector<2x128xf32> -> vector<2x128xf32>
    %156 = arith.addf %153, %155 : vector<2x128xf32>
    %157 = arith.negf %156 : vector<2x128xf32>
    %158 = math.exp %157 : vector<2x128xf32>
    %cst_39 = arith.constant 1.000000e+00 : f32
    %159 = vector.broadcast %cst_39 : f32 to vector<2x128xf32>
    %160 = arith.addf %159, %158 : vector<2x128xf32>
    %161 = arith.divf %159, %160 : vector<2x128xf32>
    %162 = vector.extract_strided_slice %161 {offsets = [0, 0], sizes = [2, 32], strides = [1, 1]} : vector<2x128xf32> to vector<2x32xf32>
    %163 = vector.extract_strided_slice %161 {offsets = [0, 32], sizes = [2, 32], strides = [1, 1]} : vector<2x128xf32> to vector<2x32xf32>
    %164 = vector.extract_strided_slice %161 {offsets = [0, 64], sizes = [2, 32], strides = [1, 1]} : vector<2x128xf32> to vector<2x32xf32>
    %cst_40 = arith.constant 2.000000e+00 : f32
    %165 = vector.broadcast %cst_40 : f32 to vector<2x32xf32>
    %166 = arith.mulf %165, %164 : vector<2x32xf32>
    %cst_41 = arith.constant 1.000000e+00 : f32
    %167 = vector.broadcast %cst_41 : f32 to vector<2x32xf32>
    %168 = arith.subf %166, %167 : vector<2x32xf32>
    %169 = vector.extract_strided_slice %161 {offsets = [0, 96], sizes = [2, 32], strides = [1, 1]} : vector<2x128xf32> to vector<2x32xf32>
    %170 = arith.mulf %163, %149 : vector<2x32xf32>
    %171 = arith.mulf %162, %168 : vector<2x32xf32>
    %172 = arith.addf %170, %171 : vector<2x32xf32>
    %173 = math.tanh %172 : vector<2x32xf32>
    %174 = arith.mulf %169, %173 : vector<2x32xf32>
    %175 = vector.extract_strided_slice %9 {offsets = [7, 0, 0], sizes = [1, 2, 128], strides = [1, 1, 1]} : vector<8x2x128xf32> to vector<1x2x128xf32>
    %176 = vector.shape_cast %175 : vector<1x2x128xf32> to vector<2x128xf32>
    %177 = arith.truncf %174 : vector<2x32xf32> to vector<2x32xbf16>
    %cst_42 = arith.constant dense<0.000000e+00> : vector<2x128xf32>
    %178 = tpu.matmul %177, %1, %cst_42 {dimension_numbers = #tpu.dot_dimension_numbers<[1], [0], [0], [1], [0, 0, 1, 1], [], []>} : vector<2x32xbf16>, vector<32x128xbf16>, vector<2x128xf32> -> vector<2x128xf32>
    %179 = arith.addf %176, %178 : vector<2x128xf32>
    %180 = arith.negf %179 : vector<2x128xf32>
    %181 = math.exp %180 : vector<2x128xf32>
    %cst_43 = arith.constant 1.000000e+00 : f32
    %182 = vector.broadcast %cst_43 : f32 to vector<2x128xf32>
    %183 = arith.addf %182, %181 : vector<2x128xf32>
    %184 = arith.divf %182, %183 : vector<2x128xf32>
    %185 = vector.extract_strided_slice %184 {offsets = [0, 0], sizes = [2, 32], strides = [1, 1]} : vector<2x128xf32> to vector<2x32xf32>
    %186 = vector.extract_strided_slice %184 {offsets = [0, 32], sizes = [2, 32], strides = [1, 1]} : vector<2x128xf32> to vector<2x32xf32>
    %187 = vector.extract_strided_slice %184 {offsets = [0, 64], sizes = [2, 32], strides = [1, 1]} : vector<2x128xf32> to vector<2x32xf32>
    %cst_44 = arith.constant 2.000000e+00 : f32
    %188 = vector.broadcast %cst_44 : f32 to vector<2x32xf32>
    %189 = arith.mulf %188, %187 : vector<2x32xf32>
    %cst_45 = arith.constant 1.000000e+00 : f32
    %190 = vector.broadcast %cst_45 : f32 to vector<2x32xf32>
    %191 = arith.subf %189, %190 : vector<2x32xf32>
    %192 = vector.extract_strided_slice %184 {offsets = [0, 96], sizes = [2, 32], strides = [1, 1]} : vector<2x128xf32> to vector<2x32xf32>
    %193 = arith.mulf %186, %172 : vector<2x32xf32>
    %194 = arith.mulf %185, %191 : vector<2x32xf32>
    %195 = arith.addf %193, %194 : vector<2x32xf32>
    %196 = math.tanh %195 : vector<2x32xf32>
    %197 = arith.mulf %192, %196 : vector<2x32xf32>
    %c0_46 = arith.constant 0 : index
    %c0_47 = arith.constant 0 : index
    %c0_48 = arith.constant 0 : index
    %198 = vector.load %arg5[%c0_46, %c0_47, %c0_48] : memref<2x2x32xf32, #tpu.memory_space<vmem>>, vector<1x2x32xf32>
    %199 = vector.shape_cast %198 : vector<1x2x32xf32> to vector<2x32xf32>
    %200 = vector.shape_cast %197 : vector<2x32xf32> to vector<1x2x32xf32>
    tpu.vector_store %arg5[%c0_46, %c0_47, %c0_48], %200 {strides = array<i32>} : memref<2x2x32xf32, #tpu.memory_space<vmem>>, vector<1x2x32xf32>,
    %c1_49 = arith.constant 1 : index
    %c0_50 = arith.constant 0 : index
    %c0_51 = arith.constant 0 : index
    %201 = vector.load %arg5[%c1_49, %c0_50, %c0_51] : memref<2x2x32xf32, #tpu.memory_space<vmem>>, vector<1x2x32xf32>
    %202 = vector.shape_cast %201 : vector<1x2x32xf32> to vector<2x32xf32>
    %203 = vector.shape_cast %195 : vector<2x32xf32> to vector<1x2x32xf32>
    tpu.vector_store %arg5[%c1_49, %c0_50, %c0_51], %203 {strides = array<i32>} : memref<2x2x32xf32, #tpu.memory_space<vmem>>, vector<1x2x32xf32>,
    %204 = arith.truncf %197 : vector<2x32xf32> to vector<2x32xbf16>
    %cst_52 = arith.constant dense<0.000000e+00> : vector<2x128xf32>
    %205 = tpu.matmul %204, %2, %cst_52 {dimension_numbers = #tpu.dot_dimension_numbers<[1], [0], [0], [1], [0, 0, 1, 1], [], []>} : vector<2x32xbf16>, vector<32x128xbf16>, vector<2x128xf32> -> vector<2x128xf32>
    %206 = vector.extract_strided_slice %205 {offsets = [0, 0], sizes = [2, 8], strides = [1, 1]} : vector<2x128xf32> to vector<2x8xf32>
    %207 = vector.broadcast %4 : vector<1x8xf32> to vector<2x8xf32>
    %208 = arith.addf %206, %207 : vector<2x8xf32>
    %c0_53 = arith.constant 0 : index
    %c0_54 = arith.constant 0 : index
    %209 = vector.load %arg4[%c0_53, %c0_54] : memref<2x8xf32, #tpu.memory_space<vmem>>, vector<2x8xf32>
    tpu.vector_store %arg4[%c0_53, %c0_54], %208 {strides = array<i32>} : memref<2x8xf32, #tpu.memory_space<vmem>>, vector<2x8xf32>,
    return
  }
}

</mosaic_0001>

<llo_original>
// kernel: jrvs_forward.1
$region0: #{jrvs_forward.1}
  #allocation0 [shape = 'u32[]', space=smem, size = 0x4, offset = 0x4, fixed_abs, tag = 'smem constant byte address 0x4 - core index']
  #allocation1 [shape = 'u32[144,128]{1,0:T(1,128)}', space=vmem, size = 0x12000, scoped, tag = 'internal scratch']
  %s0 = inlined_call_operand.vmem [shape: bf16[16,4], index: 0, kind: input, shape index: {}]
  %s1 = inlined_call_operand.vmem [shape: f32[2,2,32], index: 1, kind: input, shape index: {}, may-alias: {1,5}]
  %s2 = inlined_call_operand.vmem [shape: bf16[72,128], index: 2, kind: input, shape index: {}]
  %s3 = inlined_call_operand.vmem [shape: f32[2,128], index: 3, kind: input, shape index: {}]
  %s4 = inlined_call_operand.hbm [shape: f32[2,8], index: 4, kind: output, shape index: {0}]
  %s5 = inlined_call_operand.vmem [shape: f32[2,2,32], index: 5, kind: output, shape index: {1}, may-alias: {1,5}]
  %6 = xla_tuple %s4, %s5
  %s7 = sld [smem:[#allocation0]]
  $region34: #{jrvs_forward.1} parent=0
    _
  %s9 = ssub.s32 1, %s7
  %s10 = scalar_select 0, %s9, %s7
  $region1: #{jrvs_forward.1} parent=0
    #allocation2 [shape = 'u8[1024]{0}', space=vmem, size = 0x400, scoped, tag = 'output window, operand 0, single buffered']
    #allocation3 [shape = 's32[1]{0}', space=sflag, size = 0x4, scoped, tag = 'scoped memory for jrvs_forward.1']
    %11 = vsyncpa [#allocation3], 0
    // Predicated region
    $region2: #{jrvs_forward.1} parent=1 // pred_check
      _
    $region3: #{jrvs_forward.1} parent=1 // pred_check_branch
      %13 = sbr.rel (0) target = $region5
    $region4: #{jrvs_forward.1} parent=1 // pred_region
      _
    $region5: #{jrvs_forward.1} parent=1 // pred_fallthru
      _
    // Predicated region
    $region6: #{jrvs_forward.1} parent=1 // pred_check
      _
    $region7: #{jrvs_forward.1} parent=1 // pred_check_branch
      %15 = sbr.rel (0) target = $region9
    $region8: #{jrvs_forward.1} parent=1 // pred_region
      _
    $region9: #{jrvs_forward.1} parent=1 // pred_fallthru
      _
    // Predicated region
    $region10: #{jrvs_forward.1} parent=1 // pred_check
      _
    $region11: #{jrvs_forward.1} parent=1 // pred_check_branch
      %17 = sbr.rel (0) target = $region13
    $region12: #{jrvs_forward.1} parent=1 // pred_region
      _
    $region13: #{jrvs_forward.1} parent=1 // pred_fallthru
      _
    // Predicated region
    $region14: #{jrvs_forward.1} parent=1 // pred_check
      _
    $region15: #{jrvs_forward.1} parent=1 // pred_check_branch
      %19 = sbr.rel (0) target = $region17
    $region16: #{jrvs_forward.1} parent=1 // pred_region
      _
    $region17: #{jrvs_forward.1} parent=1 // pred_fallthru
      _
    %v21 = vld [vmem:[%s2] sm:$0x3]
    %v22 = vld [vmem:[%s2 + $0x4] sm:$0xf]
    %v23 = vld [vmem:[%s2 + $0x8] sm:$0xf]
    %v24 = vld [vmem:[%s2 + $0xc] sm:$0xf]
    %v25 = vld [vmem:[%s2 + $0x10] sm:$0xf]
    %v26 = vld [vmem:[%s2 + $0x14] sm:$0xf]
    %v27 = vld [vmem:[%s2 + $0x18] sm:$0xf]
    %v28 = vld [vmem:[%s2 + $0x1c] sm:$0xf]
    %v29 = vld [vmem:[%s2 + $0x20] sm:$0xf]
    %v30 = vld [vmem:[%s3] sm:$0x1]
    %v31 = vld [vmem:[%s3 + $0x1] sm:$0x1]
    %v32 = vld [vmem:[%s0] sm:$0xf]
    %v33 = vld [vmem:[%s0 + $0x4] sm:$0xf]
    %v34 = vlaneseq
    %v35 = vshrl.u32 %v34, 7
    %v36 = vsub.s32 0, %v35
    %v37 = vrot.slane %v30, %v36
    %v40 = vunpack.c.l.b16 %v32
    %v41 = vunpack.c.l.b16 %v33
    %v42 = vpack.c.b16 %v41, %v40
    %vm43 = vcmask 31744
    %v45 = vsel %vm43, %v42, 0
    %vm47 = vcmask 1041408
    %v49 = vsel %vm47, %v21, 0
    %51 = vmatprep.subr.bf16.mxu0 0
    %52 = vmatpush1.bf16.msra.mxu0 %v49
    %53 = vmatprep.subr.bf16.mxu0 0
    %54 = vmatpush1.bf16.msra.mxu0 0
    %55 = vmatprep.subr.bf16.mxu0 0
    %56 = vmatpush1.bf16.msra.mxu0 0
    %57 = vmatprep.subr.bf16.mxu0 0
    %58 = vmatpush1.bf16.msra.mxu0 0
    %59 = vmatprep.subr.bf16.mxu0 0
    %60 = vmatpush1.bf16.msra.mxu0 0
    %61 = vmatprep.subr.bf16.mxu0 0
    %62 = vmatpush1.bf16.msra.mxu0 0
    %63 = vmatprep.subr.bf16.mxu0 0
    %64 = vmatpush1.bf16.msra.mxu0 0
    %65 = vmatprep.subr.bf16.mxu0 0
    %66 = vmatpush1.bf16.msra.mxu0 0
    %67 = vmatprep.subr.bf16.mxu0 0
    %68 = vmatpush1.bf16.msra.mxu0 0
    %69 = vmatprep.subr.bf16.mxu0 0
    %70 = vmatpush1.bf16.msra.mxu0 0
    %71 = vmatprep.subr.bf16.mxu0 0
    %72 = vmatpush1.bf16.msra.mxu0 0
    %73 = vmatprep.subr.bf16.mxu0 0
    %74 = vmatpush1.bf16.msra.mxu0 0
    %75 = vmatprep.subr.bf16.mxu0 0
    %76 = vmatpush1.bf16.msra.mxu0 0
    %77 = vmatprep.subr.bf16.mxu0 0
    %78 = vmatpush1.bf16.msra.mxu0 0
    %79 = vmatprep.subr.bf16.mxu0 0
    %80 = vmatpush1.bf16.msra.mxu0 0
    %81 = vmatprep.subr.bf16.mxu0 0
    %82 = vmatpush1.bf16.msra.mxu0 0
    %83 = vmatprep.mubr.bf16.mxu0 0
    %84 = vmatmul.mubr.bf16.gmra.mrb[0].mxu0 %v45
    %v85 = vpop.f32.mrb[0].mxu0
    %v86 = vadd.f32 %v37, %v85
    %v87 = vpop.f32.mrb[0].mxu0
    %v88 = vpop.f32.mrb[0].mxu0
    %v89 = vadd.f32 %v37, %v88
    %v90 = vpop.f32.mrb[0].mxu0
    %91 = vdwg.mxu0
    %v94 = vcombine.high %v86, %v86
    %v96 = vunpack.c.l.s4 1983009808
    %v97 = vunpack.c.0.s8 %v96
    %v98 = vlaneseq
    %v99 = vshrl.u32 %v98, 7
    %v100 = vsub.s32 %v97, %v99
    %v101 = vrot.slane %v86, %v100
    %v103 = vunpack.c.l.s4 1983009808
    %v104 = vunpack.c.0.s8 %v103
    %v105 = vlaneseq
    %v106 = vshrl.u32 %v105, 7
    %v107 = vsub.s32 %v104, %v106
    %v108 = vrot.slane %v94, %v107
    %v109 = vcombine.high %v101, %v101
    %v110 = vcombine.high %v108, %v108
    %v111 = vcombine.high %v89, %v89
    %v113 = vunpack.c.l.s4 1983009808
    %v114 = vunpack.c.0.s8 %v113
    %v115 = vlaneseq
    %v116 = vshrl.u32 %v115, 7
    %v117 = vsub.s32 %v114, %v116
    %v118 = vrot.slane %v89, %v117
    %v120 = vunpack.c.l.s4 1983009808
    %v121 = vunpack.c.0.s8 %v120
    %v122 = vlaneseq
    %v123 = vshrl.u32 %v122, 7
    %v124 = vsub.s32 %v121, %v123
    %v125 = vrot.slane %v111, %v124
    %v126 = vcombine.high %v118, %v118
    %v127 = vcombine.high %v125, %v125
    %v136 = vld [vmem:[%s1] sm:$0x3]
    %s137 = scalar_lea.vmem %s1, 2
    %v138 = vld [vmem:[%s137] sm:$0x3]
    %v139 = vpack.c.bf16 %v136, %v136
    %v144 = vunpack.c.l.b16 %v22
    %v145 = vunpack.c.l.b16 %v23
    %v146 = vunpack.c.l.b16 %v24
    %v147 = vunpack.c.l.b16 %v25
    %v148 = vpack.c.b16 %v145, %v144
    %v149 = vpack.c.b16 %v147, %v146
    %vm152 = vcmask 261120
    %v154 = vsel %vm152, %v139, 0
    %156 = vmatprep.subr.bf16.mxu0 0
    %157 = vmatpush1.bf16.msra.mxu0 %v148
    %158 = vmatprep.subr.bf16.mxu0 0
    %159 = vmatpush1.bf16.msra.mxu0 %v149
    %160 = vmatprep.subr.bf16.mxu0 0
    %161 = vmatpush1.bf16.msra.mxu0 0
    %162 = vmatprep.subr.bf16.mxu0 0
    %163 = vmatpush1.bf16.msra.mxu0 0
    %164 = vmatprep.subr.bf16.mxu0 0
    %165 = vmatpush1.bf16.msra.mxu0 0
    %166 = vmatprep.subr.bf16.mxu0 0
    %167 = vmatpush1.bf16.msra.mxu0 0
    %168 = vmatprep.subr.bf16.mxu0 0
    %169 = vmatpush1.bf16.msra.mxu0 0
    %170 = vmatprep.subr.bf16.mxu0 0
    %171 = vmatpush1.bf16.msra.mxu0 0
    %172 = vmatprep.subr.bf16.mxu0 0
    %173 = vmatpush1.bf16.msra.mxu0 0
    %174 = vmatprep.subr.bf16.mxu0 0
    %175 = vmatpush1.bf16.msra.mxu0 0
    %176 = vmatprep.subr.bf16.mxu0 0
    %177 = vmatpush1.bf16.msra.mxu0 0
    %178 = vmatprep.subr.bf16.mxu0 0
    %179 = vmatpush1.bf16.msra.mxu0 0
    %180 = vmatprep.subr.bf16.mxu0 0
    %181 = vmatpush1.bf16.msra.mxu0 0
    %182 = vmatprep.subr.bf16.mxu0 0
    %183 = vmatpush1.bf16.msra.mxu0 0
    %184 = vmatprep.subr.bf16.mxu0 0
    %185 = vmatpush1.bf16.msra.mxu0 0
    %186 = vmatprep.subr.bf16.mxu0 0
    %187 = vmatpush1.bf16.msra.mxu0 0
    %188 = vmatprep.mubr.bf16.mxu0 0
    %189 = vmatmul.mubr.bf16.gmra.mrb[0].mxu0 %v154
    %v190 = vpop.f32.mrb[0].mxu0
    %v191 = vadd.f32 0.0, %v190
    %v192 = vpop.f32.mrb[0].mxu0
    %v193 = vpop.f32.mrb[0].mxu0
    %v194 = vpop.f32.mrb[0].mxu0
    %195 = vdwg.mxu0
    %v196 = vadd.f32 %v101, %v191
    %v197 = vxor.u32 %v196, 2147483648
    %v198 = vmul.f32 %v197, 1.442695
    %v199 = vpow.pop %v198
    %v200 = vadd.f32 %v199, 1.0
    %v201 = vrcp.pop %v200
    %v202 = vmul.f32 1.0, %v201
    %v203 = vmul.f32 %v202, 2.0
    %v204 = vsub.f32 %v203, 1.0
    %v207 = vunpack.c.l.s4 1983009808
    %v208 = vunpack.c.0.s8 %v207
    %v209 = vlaneseq
    %v210 = vshrl.u32 %v209, 7
    %v211 = vsub.s32 %v208, %v210
    %v212 = vrot.slane %v138, %v211
    %213 = vrot.lane.b32.xlu0 %v212, 32
    %v214 = vpop.permute.xlu0 %213
    %v216 = vmul.f32 %v202, %v214
    %218 = vrot.lane.b32.xlu0 %v204, 64
    %v219 = vpop.permute.xlu0 %218
    %v221 = vmul.f32 %v202, %v219
    %223 = vrot.lane.b32.xlu0 %v221, 32
    %v224 = vpop.permute.xlu0 %223
    %v226 = vadd.f32 %v216, %v224
    %v227 = vtanh.pop %v226
    %229 = vrot.lane.b32.xlu0 %v227, 64
    %v230 = vpop.permute.xlu0 %229
    %v232 = vmul.f32 %v202, %v230
    %v233 = vpack.c.bf16 %v232, %v232
    %235 = vrot.lane.b32.xlu0 %v233, 32
    %v236 = vpop.permute.xlu0 %235
    %v238 = vsel %vm152, %v236, 0
    %240 = vmatprep.subr.bf16.mxu0 0
    %241 = vmatpush1.bf16.msra.mxu0 %v148
    %242 = vmatprep.subr.bf16.mxu0 0
    %243 = vmatpush1.bf16.msra.mxu0 %v149
    %244 = vmatprep.subr.bf16.mxu0 0
    %245 = vmatpush1.bf16.msra.mxu0 0
    %246 = vmatprep.subr.bf16.mxu0 0
    %247 = vmatpush1.bf16.msra.mxu0 0
    %248 = vmatprep.subr.bf16.mxu0 0
    %249 = vmatpush1.bf16.msra.mxu0 0
    %250 = vmatprep.subr.bf16.mxu0 0
    %251 = vmatpush1.bf16.msra.mxu0 0
    %252 = vmatprep.subr.bf16.mxu0 0
    %253 = vmatpush1.bf16.msra.mxu0 0
    %254 = vmatprep.subr.bf16.mxu0 0
    %255 = vmatpush1.bf16.msra.mxu0 0
    %256 = vmatprep.subr.bf16.mxu0 0
    %257 = vmatpush1.bf16.msra.mxu0 0
    %258 = vmatprep.subr.bf16.mxu0 0
    %259 = vmatpush1.bf16.msra.mxu0 0
    %260 = vmatprep.subr.bf16.mxu0 0
    %261 = vmatpush1.bf16.msra.mxu0 0
    %262 = vmatprep.subr.bf16.mxu0 0
    %263 = vmatpush1.bf16.msra.mxu0 0
    %264 = vmatprep.subr.bf16.mxu0 0
    %265 = vmatpush1.bf16.msra.mxu0 0
    %266 = vmatprep.subr.bf16.mxu0 0
    %267 = vmatpush1.bf16.msra.mxu0 0
    %268 = vmatprep.subr.bf16.mxu0 0
    %269 = vmatpush1.bf16.msra.mxu0 0
    %270 = vmatprep.subr.bf16.mxu0 0
    %271 = vmatpush1.bf16.msra.mxu0 0
    %272 = vmatprep.mubr.bf16.mxu0 0
    %273 = vmatmul.mubr.bf16.gmra.mrb[0].mxu0 %v238
    %v274 = vpop.f32.mrb[0].mxu0
    %v275 = vadd.f32 0.0, %v274
    %v276 = vpop.f32.mrb[0].mxu0
    %v277 = vpop.f32.mrb[0].mxu0
    %v278 = vpop.f32.mrb[0].mxu0
    %279 = vdwg.mxu0
    %v280 = vadd.f32 %v109, %v275
    %v281 = vxor.u32 %v280, 2147483648
    %v282 = vmul.f32 %v281, 1.442695
    %v283 = vpow.pop %v282
    %v284 = vadd.f32 %v283, 1.0
    %v285 = vrcp.pop %v284
    %v286 = vmul.f32 1.0, %v285
    %v287 = vmul.f32 %v286, 2.0
    %v288 = vsub.f32 %v287, 1.0
    %v289 = vmul.f32 %v286, %v226
    %291 = vrot.lane.b32.xlu0 %v288, 64
    %v292 = vpop.permute.xlu0 %291
    %v294 = vmul.f32 %v286, %v292
    %296 = vrot.lane.b32.xlu0 %v294, 32
    %v297 = vpop.permute.xlu0 %296
    %v299 = vadd.f32 %v289, %v297
    %v300 = vtanh.pop %v299
    %302 = vrot.lane.b32.xlu0 %v300, 64
    %v303 = vpop.permute.xlu0 %302
    %v305 = vmul.f32 %v286, %v303
    %v306 = vpack.c.bf16 %v305, %v305
    %308 = vrot.lane.b32.xlu0 %v306, 32
    %v309 = vpop.permute.xlu0 %308
    %v311 = vsel %vm152, %v309, 0
    %313 = vmatprep.subr.bf16.mxu0 0
    %314 = vmatpush1.bf16.msra.mxu0 %v148
    %315 = vmatprep.subr.bf16.mxu0 0
    %316 = vmatpush1.bf16.msra.mxu0 %v149
    %317 = vmatprep.subr.bf16.mxu0 0
    %318 = vmatpush1.bf16.msra.mxu0 0
    %319 = vmatprep.subr.bf16.mxu0 0
    %320 = vmatpush1.bf16.msra.mxu0 0
    %321 = vmatprep.subr.bf16.mxu0 0
    %322 = vmatpush1.bf16.msra.mxu0 0
    %323 = vmatprep.subr.bf16.mxu0 0
    %324 = vmatpush1.bf16.msra.mxu0 0
    %325 = vmatprep.subr.bf16.mxu0 0
    %326 = vmatpush1.bf16.msra.mxu0 0
    %327 = vmatprep.subr.bf16.mxu0 0
    %328 = vmatpush1.bf16.msra.mxu0 0
    %329 = vmatprep.subr.bf16.mxu0 0
    %330 = vmatpush1.bf16.msra.mxu0 0
    %331 = vmatprep.subr.bf16.mxu0 0
    %332 = vmatpush1.bf16.msra.mxu0 0
    %333 = vmatprep.subr.bf16.mxu0 0
    %334 = vmatpush1.bf16.msra.mxu0 0
    %335 = vmatprep.subr.bf16.mxu0 0
    %336 = vmatpush1.bf16.msra.mxu0 0
    %337 = vmatprep.subr.bf16.mxu0 0
    %338 = vmatpush1.bf16.msra.mxu0 0
    %339 = vmatprep.subr.bf16.mxu0 0
    %340 = vmatpush1.bf16.msra.mxu0 0
    %341 = vmatprep.subr.bf16.mxu0 0
    %342 = vmatpush1.bf16.msra.mxu0 0
    %343 = vmatprep.subr.bf16.mxu0 0
    %344 = vmatpush1.bf16.msra.mxu0 0
    %345 = vmatprep.mubr.bf16.mxu0 0
    %346 = vmatmul.mubr.bf16.gmra.mrb[0].mxu0 %v311
    %v347 = vpop.f32.mrb[0].mxu0
    %v348 = vadd.f32 0.0, %v347
    %v349 = vpop.f32.mrb[0].mxu0
    %v350 = vpop.f32.mrb[0].mxu0
    %v351 = vpop.f32.mrb[0].mxu0
    %352 = vdwg.mxu0
    %v353 = vadd.f32 %v108, %v348
    %v354 = vxor.u32 %v353, 2147483648
    %v355 = vmul.f32 %v354, 1.442695
    %v356 = vpow.pop %v355
    %v357 = vadd.f32 %v356, 1.0
    %v358 = vrcp.pop %v357
    %v359 = vmul.f32 1.0, %v358
    %v360 = vmul.f32 %v359, 2.0
    %v361 = vsub.f32 %v360, 1.0
    %v362 = vmul.f32 %v359, %v299
    %364 = vrot.lane.b32.xlu0 %v361, 64
    %v365 = vpop.permute.xlu0 %364
    %v367 = vmul.f32 %v359, %v365
    %369 = vrot.lane.b32.xlu0 %v367, 32
    %v370 = vpop.permute.xlu0 %369
    %v372 = vadd.f32 %v362, %v370
    %v373 = vtanh.pop %v372
    %375 = vrot.lane.b32.xlu0 %v373, 64
    %v376 = vpop.permute.xlu0 %375
    %v378 = vmul.f32 %v359, %v376
    %v379 = vpack.c.bf16 %v378, %v378
    %381 = vrot.lane.b32.xlu0 %v379, 32
    %v382 = vpop.permute.xlu0 %381
    %v384 = vsel %vm152, %v382, 0
    %386 = vmatprep.subr.bf16.mxu0 0
    %387 = vmatpush1.bf16.msra.mxu0 %v148
    %388 = vmatprep.subr.bf16.mxu0 0
    %389 = vmatpush1.bf16.msra.mxu0 %v149
    %390 = vmatprep.subr.bf16.mxu0 0
    %391 = vmatpush1.bf16.msra.mxu0 0
    %392 = vmatprep.subr.bf16.mxu0 0
    %393 = vmatpush1.bf16.msra.mxu0 0
    %394 = vmatprep.subr.bf16.mxu0 0
    %395 = vmatpush1.bf16.msra.mxu0 0
    %396 = vmatprep.subr.bf16.mxu0 0
    %397 = vmatpush1.bf16.msra.mxu0 0
    %398 = vmatprep.subr.bf16.mxu0 0
    %399 = vmatpush1.bf16.msra.mxu0 0
    %400 = vmatprep.subr.bf16.mxu0 0
    %401 = vmatpush1.bf16.msra.mxu0 0
    %402 = vmatprep.subr.bf16.mxu0 0
    %403 = vmatpush1.bf16.msra.mxu0 0
    %404 = vmatprep.subr.bf16.mxu0 0
    %405 = vmatpush1.bf16.msra.mxu0 0
    %406 = vmatprep.subr.bf16.mxu0 0
    %407 = vmatpush1.bf16.msra.mxu0 0
    %408 = vmatprep.subr.bf16.mxu0 0
    %409 = vmatpush1.bf16.msra.mxu0 0
    %410 = vmatprep.subr.bf16.mxu0 0
    %411 = vmatpush1.bf16.msra.mxu0 0
    %412 = vmatprep.subr.bf16.mxu0 0
    %413 = vmatpush1.bf16.msra.mxu0 0
    %414 = vmatprep.subr.bf16.mxu0 0
    %415 = vmatpush1.bf16.msra.mxu0 0
    %416 = vmatprep.subr.bf16.mxu0 0
    %417 = vmatpush1.bf16.msra.mxu0 0
    %418 = vmatprep.mubr.bf16.mxu0 0
    %419 = vmatmul.mubr.bf16.gmra.mrb[0].mxu0 %v384
    %v420 = vpop.f32.mrb[0].mxu0
    %v421 = vadd.f32 0.0, %v420
    %v422 = vpop.f32.mrb[0].mxu0
    %v423 = vpop.f32.mrb[0].mxu0
    %v424 = vpop.f32.mrb[0].mxu0
    %425 = vdwg.mxu0
    %v426 = vadd.f32 %v110, %v421
    %v427 = vxor.u32 %v426, 2147483648
    %v428 = vmul.f32 %v427, 1.442695
    %v429 = vpow.pop %v428
    %v430 = vadd.f32 %v429, 1.0
    %v431 = vrcp.pop %v430
    %v432 = vmul.f32 1.0, %v431
    %v433 = vmul.f32 %v432, 2.0
    %v434 = vsub.f32 %v433, 1.0
    %v435 = vmul.f32 %v432, %v372
    %437 = vrot.lane.b32.xlu0 %v434, 64
    %v438 = vpop.permute.xlu0 %437
    %v440 = vmul.f32 %v432, %v438
    %442 = vrot.lane.b32.xlu0 %v440, 32
    %v443 = vpop.permute.xlu0 %442
    %v445 = vadd.f32 %v435, %v443
    %v446 = vtanh.pop %v445
    %448 = vrot.lane.b32.xlu0 %v446, 64
    %v449 = vpop.permute.xlu0 %448
    %v451 = vmul.f32 %v432, %v449
    %v452 = vpack.c.bf16 %v451, %v451
    %454 = vrot.lane.b32.xlu0 %v452, 32
    %v455 = vpop.permute.xlu0 %454
    %v457 = vsel %vm152, %v455, 0
    %459 = vmatprep.subr.bf16.mxu0 0
    %460 = vmatpush1.bf16.msra.mxu0 %v148
    %461 = vmatprep.subr.bf16.mxu0 0
    %462 = vmatpush1.bf16.msra.mxu0 %v149
    %463 = vmatprep.subr.bf16.mxu0 0
    %464 = vmatpush1.bf16.msra.mxu0 0
    %465 = vmatprep.subr.bf16.mxu0 0
    %466 = vmatpush1.bf16.msra.mxu0 0
    %467 = vmatprep.subr.bf16.mxu0 0
    %468 = vmatpush1.bf16.msra.mxu0 0
    %469 = vmatprep.subr.bf16.mxu0 0
    %470 = vmatpush1.bf16.msra.mxu0 0
    %471 = vmatprep.subr.bf16.mxu0 0
    %472 = vmatpush1.bf16.msra.mxu0 0
    %473 = vmatprep.subr.bf16.mxu0 0
    %474 = vmatpush1.bf16.msra.mxu0 0
    %475 = vmatprep.subr.bf16.mxu0 0
    %476 = vmatpush1.bf16.msra.mxu0 0
    %477 = vmatprep.subr.bf16.mxu0 0
    %478 = vmatpush1.bf16.msra.mxu0 0
    %479 = vmatprep.subr.bf16.mxu0 0
    %480 = vmatpush1.bf16.msra.mxu0 0
    %481 = vmatprep.subr.bf16.mxu0 0
    %482 = vmatpush1.bf16.msra.mxu0 0
    %483 = vmatprep.subr.bf16.mxu0 0
    %484 = vmatpush1.bf16.msra.mxu0 0
    %485 = vmatprep.subr.bf16.mxu0 0
    %486 = vmatpush1.bf16.msra.mxu0 0
    %487 = vmatprep.subr.bf16.mxu0 0
    %488 = vmatpush1.bf16.msra.mxu0 0
    %489 = vmatprep.subr.bf16.mxu0 0
    %490 = vmatpush1.bf16.msra.mxu0 0
    %491 = vmatprep.mubr.bf16.mxu0 0
    %492 = vmatmul.mubr.bf16.gmra.mrb[0].mxu0 %v457
    %v493 = vpop.f32.mrb[0].mxu0
    %v494 = vadd.f32 0.0, %v493
    %v495 = vpop.f32.mrb[0].mxu0
    %v496 = vpop.f32.mrb[0].mxu0
    %v497 = vpop.f32.mrb[0].mxu0
    %498 = vdwg.mxu0
    %v499 = vadd.f32 %v118, %v494
    %v500 = vxor.u32 %v499, 2147483648
    %v501 = vmul.f32 %v500, 1.442695
    %v502 = vpow.pop %v501
    %v503 = vadd.f32 %v502, 1.0
    %v504 = vrcp.pop %v503
    %v505 = vmul.f32 1.0, %v504
    %v506 = vmul.f32 %v505, 2.0
    %v507 = vsub.f32 %v506, 1.0
    %v508 = vmul.f32 %v505, %v445
    %510 = vrot.lane.b32.xlu0 %v507, 64
    %v511 = vpop.permute.xlu0 %510
    %v513 = vmul.f32 %v505, %v511
    %515 = vrot.lane.b32.xlu0 %v513, 32
    %v516 = vpop.permute.xlu0 %515
    %v518 = vadd.f32 %v508, %v516
    %v519 = vtanh.pop %v518
    %521 = vrot.lane.b32.xlu0 %v519, 64
    %v522 = vpop.permute.xlu0 %521
    %v524 = vmul.f32 %v505, %v522
    %v525 = vpack.c.bf16 %v524, %v524
    %527 = vrot.lane.b32.xlu0 %v525, 32
    %v528 = vpop.permute.xlu0 %527
    %v530 = vsel %vm152, %v528, 0
    %532 = vmatprep.subr.bf16.mxu0 0
    %533 = vmatpush1.bf16.msra.mxu0 %v148
    %534 = vmatprep.subr.bf16.mxu0 0
    %535 = vmatpush1.bf16.msra.mxu0 %v149
    %536 = vmatprep.subr.bf16.mxu0 0
    %537 = vmatpush1.bf16.msra.mxu0 0
    %538 = vmatprep.subr.bf16.mxu0 0
    %539 = vmatpush1.bf16.msra.mxu0 0
    %540 = vmatprep.subr.bf16.mxu0 0
    %541 = vmatpush1.bf16.msra.mxu0 0
    %542 = vmatprep.subr.bf16.mxu0 0
    %543 = vmatpush1.bf16.msra.mxu0 0
    %544 = vmatprep.subr.bf16.mxu0 0
    %545 = vmatpush1.bf16.msra.mxu0 0
    %546 = vmatprep.subr.bf16.mxu0 0
    %547 = vmatpush1.bf16.msra.mxu0 0
    %548 = vmatprep.subr.bf16.mxu0 0
    %549 = vmatpush1.bf16.msra.mxu0 0
    %550 = vmatprep.subr.bf16.mxu0 0
    %551 = vmatpush1.bf16.msra.mxu0 0
    %552 = vmatprep.subr.bf16.mxu0 0
    %553 = vmatpush1.bf16.msra.mxu0 0
    %554 = vmatprep.subr.bf16.mxu0 0
    %555 = vmatpush1.bf16.msra.mxu0 0
    %556 = vmatprep.subr.bf16.mxu0 0
    %557 = vmatpush1.bf16.msra.mxu0 0
    %558 = vmatprep.subr.bf16.mxu0 0
    %559 = vmatpush1.bf16.msra.mxu0 0
    %560 = vmatprep.subr.bf16.mxu0 0
    %561 = vmatpush1.bf16.msra.mxu0 0
    %562 = vmatprep.subr.bf16.mxu0 0
    %563 = vmatpush1.bf16.msra.mxu0 0
    %564 = vmatprep.mubr.bf16.mxu0 0
    %565 = vmatmul.mubr.bf16.gmra.mrb[0].mxu0 %v530
    %v566 = vpop.f32.mrb[0].mxu0
    %v567 = vadd.f32 0.0, %v566
    %v568 = vpop.f32.mrb[0].mxu0
    %v569 = vpop.f32.mrb[0].mxu0
    %v570 = vpop.f32.mrb[0].mxu0
    %571 = vdwg.mxu0
    %v572 = vadd.f32 %v126, %v567
    %v573 = vxor.u32 %v572, 2147483648
    %v574 = vmul.f32 %v573, 1.442695
    %v575 = vpow.pop %v574
    %v576 = vadd.f32 %v575, 1.0
    %v577 = vrcp.pop %v576
    %v578 = vmul.f32 1.0, %v577
    %v579 = vmul.f32 %v578, 2.0
    %v580 = vsub.f32 %v579, 1.0
    %v581 = vmul.f32 %v578, %v518
    %583 = vrot.lane.b32.xlu0 %v580, 64
    %v584 = vpop.permute.xlu0 %583
    %v586 = vmul.f32 %v578, %v584
    %588 = vrot.lane.b32.xlu0 %v586, 32
    %v589 = vpop.permute.xlu0 %588
    %v591 = vadd.f32 %v581, %v589
    %v592 = vtanh.pop %v591
    %594 = vrot.lane.b32.xlu0 %v592, 64
    %v595 = vpop.permute.xlu0 %594
    %v597 = vmul.f32 %v578, %v595
    %v598 = vpack.c.bf16 %v597, %v597
    %600 = vrot.lane.b32.xlu0 %v598, 32
    %v601 = vpop.permute.xlu0 %600
    %v603 = vsel %vm152, %v601, 0
    %605 = vmatprep.subr.bf16.mxu0 0
    %606 = vmatpush1.bf16.msra.mxu0 %v148
    %607 = vmatprep.subr.bf16.mxu0 0
    %608 = vmatpush1.bf16.msra.mxu0 %v149
    %609 = vmatprep.subr.bf16.mxu0 0
    %610 = vmatpush1.bf16.msra.mxu0 0
    %611 = vmatprep.subr.bf16.mxu0 0
    %612 = vmatpush1.bf16.msra.mxu0 0
    %613 = vmatprep.subr.bf16.mxu0 0
    %614 = vmatpush1.bf16.msra.mxu0 0
    %615 = vmatprep.subr.bf16.mxu0 0
    %616 = vmatpush1.bf16.msra.mxu0 0
    %617 = vmatprep.subr.bf16.mxu0 0
    %618 = vmatpush1.bf16.msra.mxu0 0
    %619 = vmatprep.subr.bf16.mxu0 0
    %620 = vmatpush1.bf16.msra.mxu0 0
    %621 = vmatprep.subr.bf16.mxu0 0
    %622 = vmatpush1.bf16.msra.mxu0 0
    %623 = vmatprep.subr.bf16.mxu0 0
    %624 = vmatpush1.bf16.msra.mxu0 0
    %625 = vmatprep.subr.bf16.mxu0 0
    %626 = vmatpush1.bf16.msra.mxu0 0
    %627 = vmatprep.subr.bf16.mxu0 0
    %628 = vmatpush1.bf16.msra.mxu0 0
    %629 = vmatprep.subr.bf16.mxu0 0
    %630 = vmatpush1.bf16.msra.mxu0 0
    %631 = vmatprep.subr.bf16.mxu0 0
    %632 = vmatpush1.bf16.msra.mxu0 0
    %633 = vmatprep.subr.bf16.mxu0 0
    %634 = vmatpush1.bf16.msra.mxu0 0
    %635 = vmatprep.subr.bf16.mxu0 0
    %636 = vmatpush1.bf16.msra.mxu0 0
    %637 = vmatprep.mubr.bf16.mxu0 0
    %638 = vmatmul.mubr.bf16.gmra.mrb[0].mxu0 %v603
    %v639 = vpop.f32.mrb[0].mxu0
    %v640 = vadd.f32 0.0, %v639
    %v641 = vpop.f32.mrb[0].mxu0
    %v642 = vpop.f32.mrb[0].mxu0
    %v643 = vpop.f32.mrb[0].mxu0
    %644 = vdwg.mxu0
    %v645 = vadd.f32 %v125, %v640
    %v646 = vxor.u32 %v645, 2147483648
    %v647 = vmul.f32 %v646, 1.442695
    %v648 = vpow.pop %v647
    %v649 = vadd.f32 %v648, 1.0
    %v650 = vrcp.pop %v649
    %v651 = vmul.f32 1.0, %v650
    %v652 = vmul.f32 %v651, 2.0
    %v653 = vsub.f32 %v652, 1.0
    %v654 = vmul.f32 %v651, %v591
    %656 = vrot.lane.b32.xlu0 %v653, 64
    %v657 = vpop.permute.xlu0 %656
    %v659 = vmul.f32 %v651, %v657
    %661 = vrot.lane.b32.xlu0 %v659, 32
    %v662 = vpop.permute.xlu0 %661
    %v664 = vadd.f32 %v654, %v662
    %v665 = vtanh.pop %v664
    %667 = vrot.lane.b32.xlu0 %v665, 64
    %v668 = vpop.permute.xlu0 %667
    %v670 = vmul.f32 %v651, %v668
    %v671 = vpack.c.bf16 %v670, %v670
    %673 = vrot.lane.b32.xlu0 %v671, 32
    %v674 = vpop.permute.xlu0 %673
    %v676 = vsel %vm152, %v674, 0
    %678 = vmatprep.subr.bf16.mxu0 0
    %679 = vmatpush1.bf16.msra.mxu0 %v148
    %680 = vmatprep.subr.bf16.mxu0 0
    %681 = vmatpush1.bf16.msra.mxu0 %v149
    %682 = vmatprep.subr.bf16.mxu0 0
    %683 = vmatpush1.bf16.msra.mxu0 0
    %684 = vmatprep.subr.bf16.mxu0 0
    %685 = vmatpush1.bf16.msra.mxu0 0
    %686 = vmatprep.subr.bf16.mxu0 0
    %687 = vmatpush1.bf16.msra.mxu0 0
    %688 = vmatprep.subr.bf16.mxu0 0
    %689 = vmatpush1.bf16.msra.mxu0 0
    %690 = vmatprep.subr.bf16.mxu0 0
    %691 = vmatpush1.bf16.msra.mxu0 0
    %692 = vmatprep.subr.bf16.mxu0 0
    %693 = vmatpush1.bf16.msra.mxu0 0
    %694 = vmatprep.subr.bf16.mxu0 0
    %695 = vmatpush1.bf16.msra.mxu0 0
    %696 = vmatprep.subr.bf16.mxu0 0
    %697 = vmatpush1.bf16.msra.mxu0 0
    %698 = vmatprep.subr.bf16.mxu0 0
    %699 = vmatpush1.bf16.msra.mxu0 0
    %700 = vmatprep.subr.bf16.mxu0 0
    %701 = vmatpush1.bf16.msra.mxu0 0
    %702 = vmatprep.subr.bf16.mxu0 0
    %703 = vmatpush1.bf16.msra.mxu0 0
    %704 = vmatprep.subr.bf16.mxu0 0
    %705 = vmatpush1.bf16.msra.mxu0 0
    %706 = vmatprep.subr.bf16.mxu0 0
    %707 = vmatpush1.bf16.msra.mxu0 0
    %708 = vmatprep.subr.bf16.mxu0 0
    %709 = vmatpush1.bf16.msra.mxu0 0
    %710 = vmatprep.mubr.bf16.mxu0 0
    %711 = vmatmul.mubr.bf16.gmra.mrb[0].mxu0 %v676
    %v712 = vpop.f32.mrb[0].mxu0
    %v713 = vadd.f32 0.0, %v712
    %v714 = vpop.f32.mrb[0].mxu0
    %v715 = vpop.f32.mrb[0].mxu0
    %v716 = vpop.f32.mrb[0].mxu0
    %717 = vdwg.mxu0
    %v718 = vadd.f32 %v127, %v713
    %v719 = vxor.u32 %v718, 2147483648
    %v720 = vmul.f32 %v719, 1.442695
    %v721 = vpow.pop %v720
    %v722 = vadd.f32 %v721, 1.0
    %v723 = vrcp.pop %v722
    %v724 = vmul.f32 1.0, %v723
    %v725 = vmul.f32 %v724, 2.0
    %v726 = vsub.f32 %v725, 1.0
    %v727 = vmul.f32 %v724, %v664
    %729 = vrot.lane.b32.xlu0 %v726, 64
    %v730 = vpop.permute.xlu0 %729
    %v732 = vmul.f32 %v724, %v730
    %734 = vrot.lane.b32.xlu0 %v732, 32
    %v735 = vpop.permute.xlu0 %734
    %v737 = vadd.f32 %v727, %v735
    %v738 = vtanh.pop %v737
    %740 = vrot.lane.b32.xlu0 %v738, 64
    %v741 = vpop.permute.xlu0 %740
    %v743 = vmul.f32 %v724, %v741
    %v746 = vunpack.c.l.s4 1983009808
    %v747 = vunpack.c.0.s8 %v746
    %v748 = vlaneseq
    %v749 = vshrl.u32 %v748, 7
    %v750 = vsub.s32 %v747, %v749
    %v751 = vrot.slane %v743, %v750
    %752 = vrot.lane.b32.xlu0 %v751, 32
    %v753 = vpop.permute.xlu0 %752
    %vm755 = vcmask 254976
    %756 = vst.msk [vmem:[%s5] sm:$0x3] %vm755, %v753
    %v759 = vunpack.c.l.s4 1983009808
    %v760 = vunpack.c.0.s8 %v759
    %v761 = vlaneseq
    %v762 = vshrl.u32 %v761, 7
    %v763 = vsub.s32 %v760, %v762
    %v764 = vrot.slane %v737, %v763
    %765 = vrot.lane.b32.xlu0 %v764, 96
    %v766 = vpop.permute.xlu0 %765
    %s768 = scalar_lea.vmem %s5, 2
    %769 = vst.msk [vmem:[%s768] sm:$0x3] %vm755, %v766
    %v770 = vpack.c.bf16 %v743, %v743
    %772 = vrot.lane.b32.xlu0 %v770, 32
    %v773 = vpop.permute.xlu0 %772
    %v778 = vunpack.c.l.b16 %v26
    %v779 = vunpack.c.l.b16 %v27
    %v780 = vunpack.c.l.b16 %v28
    %v781 = vunpack.c.l.b16 %v29
    %v782 = vpack.c.b16 %v779, %v778
    %v783 = vpack.c.b16 %v781, %v780
    %v787 = vsel %vm152, %v773, 0
    %789 = vmatprep.subr.bf16.mxu0 0
    %790 = vmatpush1.bf16.msra.mxu0 %v782
    %791 = vmatprep.subr.bf16.mxu0 0
    %792 = vmatpush1.bf16.msra.mxu0 %v783
    %793 = vmatprep.subr.bf16.mxu0 0
    %794 = vmatpush1.bf16.msra.mxu0 0
    %795 = vmatprep.subr.bf16.mxu0 0
    %796 = vmatpush1.bf16.msra.mxu0 0
    %797 = vmatprep.subr.bf16.mxu0 0
    %798 = vmatpush1.bf16.msra.mxu0 0
    %799 = vmatprep.subr.bf16.mxu0 0
    %800 = vmatpush1.bf16.msra.mxu0 0
    %801 = vmatprep.subr.bf16.mxu0 0
    %802 = vmatpush1.bf16.msra.mxu0 0
    %803 = vmatprep.subr.bf16.mxu0 0
    %804 = vmatpush1.bf16.msra.mxu0 0
    %805 = vmatprep.subr.bf16.mxu0 0
    %806 = vmatpush1.bf16.msra.mxu0 0
    %807 = vmatprep.subr.bf16.mxu0 0
    %808 = vmatpush1.bf16.msra.mxu0 0
    %809 = vmatprep.subr.bf16.mxu0 0
    %810 = vmatpush1.bf16.msra.mxu0 0
    %811 = vmatprep.subr.bf16.mxu0 0
    %812 = vmatpush1.bf16.msra.mxu0 0
    %813 = vmatprep.subr.bf16.mxu0 0
    %814 = vmatpush1.bf16.msra.mxu0 0
    %815 = vmatprep.subr.bf16.mxu0 0
    %816 = vmatpush1.bf16.msra.mxu0 0
    %817 = vmatprep.subr.bf16.mxu0 0
    %818 = vmatpush1.bf16.msra.mxu0 0
    %819 = vmatprep.subr.bf16.mxu0 0
    %820 = vmatpush1.bf16.msra.mxu0 0
    %821 = vmatprep.mubr.bf16.mxu0 0
    %822 = vmatmul.mubr.bf16.gmra.mrb[0].mxu0 %v787
    %v823 = vpop.f32.mrb[0].mxu0
    %v824 = vadd.f32 0.0, %v823
    %v825 = vpop.f32.mrb[0].mxu0
    %v826 = vpop.f32.mrb[0].mxu0
    %v827 = vpop.f32.mrb[0].mxu0
    %828 = vdwg.mxu0
    %v829 = vlaneseq
    %v830 = vshrl.u32 %v829, 7
    %v831 = vsub.s32 0, %v830
    %v832 = vrot.slane %v31, %v831
    %v833 = vadd.f32 %v824, %v832
    %vm834 = vcmask 58368
    %835 = vst.msk [vmem:[#allocation2] sm:$0x3] %vm834, %v833
    // Predicated region
    $region18: #{jrvs_forward.1} parent=1 // pred_check
      _
    $region19: #{jrvs_forward.1} parent=1 // pred_check_branch
      %837 = sbr.rel (0) target = $region21
    $region20: #{jrvs_forward.1} parent=1 // pred_region
      %s839 = ssub.s32 32, 32
      %840 = vsyncadd [#allocation3], %s839
      %s842 = sshll.u32 [#allocation2], 4
      %s843 = int_to_ptr.vmem [resolvable:$true] %s842
      %845 = dma.vmem_to_hbm [thread:$0]  %s843, 32, %s4, [#allocation3]
    $region21: #{jrvs_forward.1} parent=1 // pred_fallthru
      _
    // Predicated region
    $region22: #{jrvs_forward.1} parent=1 // pred_check
      _
    $region23: #{jrvs_forward.1} parent=1 // pred_check_branch
      %847 = sbr.rel (0) target = $region25
    $region24: #{jrvs_forward.1} parent=1 // pred_region
      _
    $region25: #{jrvs_forward.1} parent=1 // pred_fallthru
      _
    // Predicated region
    $region26: #{jrvs_forward.1} parent=1 // pred_check
      _
    $region27: #{jrvs_forward.1} parent=1 // pred_check_branch
      %849 = sbr.rel (0) target = $region29
    $region28: #{jrvs_forward.1} parent=1 // pred_region
      %850 = dma.done [#allocation3], 32
    $region29: #{jrvs_forward.1} parent=1 // pred_fallthru
      _
    // Predicated region
    $region30: #{jrvs_forward.1} parent=1 // pred_check
      _
    $region31: #{jrvs_forward.1} parent=1 // pred_check_branch
      %852 = sbr.rel (0) target = $region33
    $region32: #{jrvs_forward.1} parent=1 // pred_region
      _
    $region33: #{jrvs_forward.1} parent=1 // pred_fallthru
      _
    %853 = vsyncpa [#allocation3], 1

</llo_original>
